<compile_context>
chip_gen: v5e
topology: v5e:2x2
jax: 0.10.0
libtpu: 0.0.40
codegen_flags: <defaults>
</compile_context>

<pallas_src>
import jax
import jax.numpy as jnp
from jax.experimental import pallas as pl
from jax.experimental.pallas import tpu as pltpu


def _round_up(x, m):
    return ((x + m - 1) // m) * m


def impute_kernel(x_ref, mask_ref, w_ref, b_ref, out_ref):
    x = x_ref[...]            # (tm, Dp) bf16
    m = mask_ref[...]         # (tm, Dp) bf16, binary (1 = observed, 0 = missing)

    x_obs = x * m             # exact in bf16 for a binary mask (zero-fill missing)

    # Linear imputation head on the MXU with f32 accumulation.
    imputed_hat = jnp.dot(x_obs, w_ref[...], preferred_element_type=jnp.float32)
    imputed_hat = imputed_hat + b_ref[...]                       # f32 bias, broadcast over rows

    # BaseModel.impute(): x*mask + imputed_hat*(1 - mask), reusing x_obs.
    m_f32 = m.astype(jnp.float32)
    out = x_obs.astype(jnp.float32) + imputed_hat * (1.0 - m_f32)
    out_ref[...] = out.astype(out_ref.dtype)


def base_model_impute(x, mask, w, b, *, tm=512):
    """Fused forward (linear head) + impute blend.

    x, mask: [..., D] f32 (leading dims are flattened to rows); w: [D, D]; b: [D] or [1, D].
    Returns the imputed tensor with the same shape as x (bf16).
    """
    orig_shape = x.shape
    D = orig_shape[-1]
    x2 = x.reshape(-1, D)
    m2 = mask.reshape(-1, D)
    N = x2.shape[0]

    Dp = _round_up(D, 128)                 # lane-dense feature axis
    tm = min(tm, _round_up(N, 8))          # don't over-tile tiny inputs
    Np = _round_up(N, tm)                  # pad rows instead of forcing N % tm == 0

    io_dtype = jnp.bfloat16
    # Zero padding is semantically inert: padded mask entries are 0 and padded
    # weight rows/cols and bias entries are 0, and padded rows/cols are sliced off.
    x_p = jnp.pad(x2, ((0, Np - N), (0, Dp - D))).astype(io_dtype)
    m_p = jnp.pad(m2, ((0, Np - N), (0, Dp - D))).astype(io_dtype)
    w_p = jnp.pad(w, ((0, Dp - D), (0, Dp - D))).astype(io_dtype)
    b_p = jnp.pad(b.reshape(1, -1), ((0, 0), (0, Dp - D))).astype(jnp.float32)

    grid = (Np // tm,)
    out = pl.pallas_call(
        impute_kernel,
        out_shape=jax.ShapeDtypeStruct((Np, Dp), io_dtype),
        grid_spec=pltpu.PrefetchScalarGridSpec(
            num_scalar_prefetch=0,
            grid=grid,
            in_specs=[
                pl.BlockSpec((tm, Dp), lambda i: (i, 0)),   # x tile
                pl.BlockSpec((tm, Dp), lambda i: (i, 0)),   # mask tile
                pl.BlockSpec((Dp, Dp), lambda i: (0, 0)),   # weight (stays VMEM-resident)
                pl.BlockSpec((1, Dp), lambda i: (0, 0)),    # bias   (stays VMEM-resident)
            ],
            out_specs=pl.BlockSpec((tm, Dp), lambda i: (i, 0)),
        ),
        compiler_params=pltpu.CompilerParams(
            dimension_semantics=("parallel",),   # rows independent -> megacore-shardable
        ),
    )(x_p, m_p, w_p, b_p)
    return out[:N, :D].reshape(orig_shape)


def reference_impute(x, mask, w, b):
    x_obs = x * mask
    imputed_hat = x_obs @ w + b.reshape(1, -1)
    return x * mask + imputed_hat * (1.0 - mask)


if __name__ == "__main__":
    key = jax.random.PRNGKey(0)
    k_x, k_m, k_w, k_b = jax.random.split(key, 4)

    batch, seq, input_dim = 2, 8, 32

    x = jax.random.normal(k_x, (batch, seq, input_dim), dtype=jnp.float32)
    # binary observed/missing mask (1 = observed)
    mask = (jax.random.uniform(k_m, (batch, seq, input_dim)) > 0.3).astype(jnp.float32)

    # deterministic synthetic parameters for the linear imputation head
    w = jax.random.normal(k_w, (input_dim, input_dim), dtype=jnp.float32) * 0.05
    b = jax.random.normal(k_b, (1, input_dim), dtype=jnp.float32) * 0.01

    out = base_model_impute(x, mask, w, b)
    out = jax.block_until_ready(out)

    ref = reference_impute(x.reshape(-1, input_dim), mask.reshape(-1, input_dim), w, b)
    ref = ref.reshape(batch, seq, input_dim)
    assert out.shape == (batch, seq, input_dim)
    # bf16 I/O: loosen tolerance accordingly (~0.4% relative rounding).
    assert jnp.allclose(out.astype(jnp.float32), ref, atol=3e-2, rtol=3e-2)

    # TODO(synk): compute_loss / uncertainty / attention_weights are abstract in
    # BaseModel and have no defined computation to translate.
    print("KERNEL_OK")
</pallas_src>

<mosaic_0001>
module attributes {stable_mosaic.version = 11 : i64} {
  func.func @impute_kernel(%arg0: i32, %arg1: memref<16x128xbf16, #tpu.memory_space<vmem>>, %arg2: memref<16x128xbf16, #tpu.memory_space<vmem>>, %arg3: memref<128x128xbf16, #tpu.memory_space<vmem>>, %arg4: memref<1x128xf32, #tpu.memory_space<vmem>>, %arg5: memref<16x128xbf16, #tpu.memory_space<vmem>>) attributes {dimension_semantics = [#tpu.dimension_semantics<parallel>], iteration_bounds = array<i64: 1>, scalar_prefetch = 0 : i64, scratch_operands = 0 : i64, tpu.core_type = #tpu.core_type<tc>, window_params = [{transform_indices = @transform_0, window_bounds = array<i64: 16, 128>}, {transform_indices = @transform_1, window_bounds = array<i64: 16, 128>}, {pipeline_mode = #tpu.pipeline_mode<synchronous>, transform_indices = @transform_2, window_bounds = array<i64: 128, 128>}, {pipeline_mode = #tpu.pipeline_mode<synchronous>, transform_indices = @transform_3, window_bounds = array<i64: 1, 128>}, {transform_indices = @transform_4, window_bounds = array<i64: 16, 128>}]} {
    %c0 = arith.constant 0 : index
    %c0_0 = arith.constant 0 : index
    %0 = vector.load %arg1[%c0, %c0_0] : memref<16x128xbf16, #tpu.memory_space<vmem>>, vector<16x128xbf16>
    %c0_1 = arith.constant 0 : index
    %c0_2 = arith.constant 0 : index
    %1 = vector.load %arg2[%c0_1, %c0_2] : memref<16x128xbf16, #tpu.memory_space<vmem>>, vector<16x128xbf16>
    %2 = arith.mulf %0, %1 : vector<16x128xbf16>
    %c0_3 = arith.constant 0 : index
    %c0_4 = arith.constant 0 : index
    %3 = vector.load %arg3[%c0_3, %c0_4] : memref<128x128xbf16, #tpu.memory_space<vmem>>, vector<128x128xbf16>
    %cst = arith.constant dense<0.000000e+00> : vector<16x128xf32>
    %4 = tpu.matmul %2, %3, %cst {dimension_numbers = #tpu.dot_dimension_numbers<[1], [0], [0], [1], [0, 0, 1, 1], [], []>} : vector<16x128xbf16>, vector<128x128xbf16>, vector<16x128xf32> -> vector<16x128xf32>
    %c0_5 = arith.constant 0 : index
    %c0_6 = arith.constant 0 : index
    %5 = vector.load %arg4[%c0_5, %c0_6] : memref<1x128xf32, #tpu.memory_space<vmem>>, vector<1x128xf32>
    %6 = vector.broadcast %5 : vector<1x128xf32> to vector<16x128xf32>
    %7 = arith.addf %4, %6 : vector<16x128xf32>
    %8 = arith.extf %1 : vector<16x128xbf16> to vector<16x128xf32>
    %9 = arith.extf %2 : vector<16x128xbf16> to vector<16x128xf32>
    %cst_7 = arith.constant 1.000000e+00 : f32
    %10 = vector.broadcast %cst_7 : f32 to vector<16x128xf32>
    %11 = arith.subf %10, %8 : vector<16x128xf32>
    %12 = arith.mulf %7, %11 : vector<16x128xf32>
    %13 = arith.addf %9, %12 : vector<16x128xf32>
    %14 = arith.truncf %13 : vector<16x128xf32> to vector<16x128xbf16>
    %c0_8 = arith.constant 0 : index
    %c0_9 = arith.constant 0 : index
    %15 = vector.load %arg5[%c0_8, %c0_9] : memref<16x128xbf16, #tpu.memory_space<vmem>>, vector<16x128xbf16>
    tpu.vector_store %arg5[%c0_8, %c0_9], %14 {strides = array<i32>} : memref<16x128xbf16, #tpu.memory_space<vmem>>, vector<16x128xbf16>,
    return
  }
  func.func @transform_0(%arg0: i32) -> (i32, i32) {
    %c0_i32 = arith.constant 0 : i32
    %c0_i32_0 = arith.constant 0 : i32
    return %arg0, %c0_i32 : i32, i32
  }
  func.func @transform_1(%arg0: i32) -> (i32, i32) {
    %c0_i32 = arith.constant 0 : i32
    %c0_i32_0 = arith.constant 0 : i32
    return %arg0, %c0_i32 : i32, i32
  }
  func.func @transform_2(%arg0: i32) -> (i32, i32) {
    %c0_i32 = arith.constant 0 : i32
    %c0_i32_0 = arith.constant 0 : i32
    %c0_i32_1 = arith.constant 0 : i32
    return %c0_i32, %c0_i32_0 : i32, i32
  }
  func.func @transform_3(%arg0: i32) -> (i32, i32) {
    %c0_i32 = arith.constant 0 : i32
    %c0_i32_0 = arith.constant 0 : i32
    %c0_i32_1 = arith.constant 0 : i32
    return %c0_i32, %c0_i32_0 : i32, i32
  }
  func.func @transform_4(%arg0: i32) -> (i32, i32) {
    %c0_i32 = arith.constant 0 : i32
    %c0_i32_0 = arith.constant 0 : i32
    return %arg0, %c0_i32 : i32, i32
  }
}

</mosaic_0001>

<llo_original>
// kernel: tpu_custom_call.1
$region0: #{tpu_custom_call.1}
  #allocation0 [shape = 'u32[]', space=smem, size = 0x4, offset = 0x4, fixed_abs, tag = 'smem constant byte address 0x4 - core index']
  #allocation1 [shape = 'u32[72,128]{1,0:T(1,128)}', space=vmem, size = 0x9000, scoped, tag = 'internal scratch']
  %s0 = inlined_call_operand.hbm [shape: bf16[16,128], index: 0, kind: input, shape index: {}]
  %s1 = inlined_call_operand.hbm [shape: bf16[16,128], index: 1, kind: input, shape index: {}]
  %s2 = inlined_call_operand.hbm [shape: bf16[128,128], index: 2, kind: input, shape index: {}]
  %s3 = inlined_call_operand.vmem [shape: f32[1,128], index: 3, kind: input, shape index: {}]
  %s4 = inlined_call_operand.hbm [shape: bf16[16,128], index: 4, kind: output, shape index: {}]
  %s5 = sld [smem:[#allocation0]]
  $region38: #{tpu_custom_call.1} parent=0
    _
  %s7 = ssub.s32 1, %s5
  %s8 = scalar_select 0, %s7, %s5
  $region1: #{tpu_custom_call.1} parent=0
    #allocation2 [shape = 'u8[4096]{0}', space=vmem, size = 0x1000, scoped, tag = 'input window, operand 0, single buffered']
    #allocation3 [shape = 's32[1]{0}', space=sflag, size = 0x4, scoped, tag = 'scoped memory for tpu_custom_call.1']
    #allocation4 [shape = 's32[1]{0}', space=sflag, size = 0x4, scoped, tag = 'scoped memory for tpu_custom_call.1']
    #allocation5 [shape = 'u8[4096]{0}', space=vmem, size = 0x1000, scoped, tag = 'input window, operand 1, single buffered']
    #allocation6 [shape = 's32[1]{0}', space=sflag, size = 0x4, scoped, tag = 'scoped memory for tpu_custom_call.1']
    #allocation7 [shape = 'u8[32768]{0}', space=vmem, size = 0x8000, scoped, tag = 'input window, operand 2, single buffered']
    #allocation8 [shape = 'u8[4096]{0}', space=vmem, size = 0x1000, scoped, tag = 'output window, operand 0, single buffered']
    %9 = vsyncpa [#allocation3], 0
    %10 = vsyncpa [#allocation6], 0
    %11 = vsyncpa [#allocation4], 0
    // Predicated region
    $region2: #{tpu_custom_call.1} parent=1 // pred_check
      _
    $region3: #{tpu_custom_call.1} parent=1 // pred_check_branch
      %13 = sbr.rel (0) target = $region5
    $region4: #{tpu_custom_call.1} parent=1 // pred_region
      %15 = vsyncadd [#allocation3], 0
      %s16 = sshll.u32 %s0, 4
      %s17 = int_to_ptr.hbm [resolvable:$true] %s16
      %s18 = sshll.u32 [#allocation2], 4
      %s19 = int_to_ptr.vmem [resolvable:$true] %s18
      %24 = dma.hbm_to_vmem [thread:$0]  %s17, 128, %s19, [#allocation3], 64, 64, 4
    $region5: #{tpu_custom_call.1} parent=1 // pred_fallthru
      _
    // Predicated region
    $region6: #{tpu_custom_call.1} parent=1 // pred_check
      _
    $region7: #{tpu_custom_call.1} parent=1 // pred_check_branch
      %26 = sbr.rel (0) target = $region9
    $region8: #{tpu_custom_call.1} parent=1 // pred_region
      %28 = vsyncadd [#allocation6], 0
      %s29 = sshll.u32 %s1, 4
      %s30 = int_to_ptr.hbm [resolvable:$true] %s29
      %s31 = sshll.u32 [#allocation5], 4
      %s32 = int_to_ptr.vmem [resolvable:$true] %s31
      %37 = dma.hbm_to_vmem [thread:$0]  %s30, 128, %s32, [#allocation6], 64, 64, 4
    $region9: #{tpu_custom_call.1} parent=1 // pred_fallthru
      _
    // Predicated region
    $region10: #{tpu_custom_call.1} parent=1 // pred_check
      _
    $region11: #{tpu_custom_call.1} parent=1 // pred_check_branch
      %39 = sbr.rel (0) target = $region13
    $region12: #{tpu_custom_call.1} parent=1 // pred_region
      %41 = vsyncadd [#allocation6], 0
      %s42 = sshll.u32 %s2, 4
      %s43 = int_to_ptr.hbm [resolvable:$true] %s42
      %s44 = sshll.u32 [#allocation7], 4
      %s45 = int_to_ptr.vmem [resolvable:$true] %s44
      %50 = dma.hbm_to_vmem [thread:$0]  %s43, 1024, %s45, [#allocation6], 64, 64, 4
    $region13: #{tpu_custom_call.1} parent=1 // pred_fallthru
      _
    // Predicated region
    $region14: #{tpu_custom_call.1} parent=1 // pred_check
      _
    $region15: #{tpu_custom_call.1} parent=1 // pred_check_branch
      %52 = sbr.rel (0) target = $region17
    $region16: #{tpu_custom_call.1} parent=1 // pred_region
      _
    $region17: #{tpu_custom_call.1} parent=1 // pred_fallthru
      _
    // Predicated region
    $region18: #{tpu_custom_call.1} parent=1 // pred_check
      _
    $region19: #{tpu_custom_call.1} parent=1 // pred_check_branch
      %54 = sbr.rel (0) target = $region21
    $region20: #{tpu_custom_call.1} parent=1 // pred_region
      %56 = dma.done [#allocation3], 128
    $region21: #{tpu_custom_call.1} parent=1 // pred_fallthru
      _
    // Predicated region
    $region22: #{tpu_custom_call.1} parent=1 // pred_check
      _
    $region23: #{tpu_custom_call.1} parent=1 // pred_check_branch
      %58 = sbr.rel (0) target = $region25
    $region24: #{tpu_custom_call.1} parent=1 // pred_region
      %60 = dma.done [#allocation6], 128
    $region25: #{tpu_custom_call.1} parent=1 // pred_fallthru
      _
    // Predicated region
    $region26: #{tpu_custom_call.1} parent=1 // pred_check
      _
    $region27: #{tpu_custom_call.1} parent=1 // pred_check_branch
      %62 = sbr.rel (0) target = $region29
    $region28: #{tpu_custom_call.1} parent=1 // pred_region
      %64 = dma.done [#allocation6], 1024
    $region29: #{tpu_custom_call.1} parent=1 // pred_fallthru
      _
    %v65 = vld [vmem:[#allocation2] sm:$0xf]
    %v66 = vld [vmem:[#allocation2 + $0x4] sm:$0xf]
    %v67 = vld [vmem:[#allocation5] sm:$0xf]
    %v68 = vld [vmem:[#allocation5 + $0x4] sm:$0xf]
    %v69 = vunpack.c.l.bf16 %v65
    %v70 = vunpack.c.l.bf16 %v66
    %v71 = vunpack.c.l.bf16 %v67
    %v72 = vunpack.c.l.bf16 %v68
    %v73 = vmul.f32 %v69, %v71
    %v74 = vmul.f32 %v70, %v72
    %v75 = vpack.c.bf16 %v73, %v73
    %v76 = vpack.c.bf16 %v74, %v74
    %v77 = vld [vmem:[#allocation7] sm:$0xf]
    %v78 = vld [vmem:[#allocation7 + $0x4] sm:$0xf]
    %v79 = vld [vmem:[#allocation7 + $0x8] sm:$0xf]
    %v80 = vld [vmem:[#allocation7 + $0xc] sm:$0xf]
    %v81 = vld [vmem:[#allocation7 + $0x10] sm:$0xf]
    %v82 = vld [vmem:[#allocation7 + $0x14] sm:$0xf]
    %v83 = vld [vmem:[#allocation7 + $0x18] sm:$0xf]
    %v84 = vld [vmem:[#allocation7 + $0x1c] sm:$0xf]
    %v85 = vld [vmem:[#allocation7 + $0x20] sm:$0xf]
    %v86 = vld [vmem:[#allocation7 + $0x24] sm:$0xf]
    %v87 = vld [vmem:[#allocation7 + $0x28] sm:$0xf]
    %v88 = vld [vmem:[#allocation7 + $0x2c] sm:$0xf]
    %v89 = vld [vmem:[#allocation7 + $0x30] sm:$0xf]
    %v90 = vld [vmem:[#allocation7 + $0x34] sm:$0xf]
    %v91 = vld [vmem:[#allocation7 + $0x38] sm:$0xf]
    %v92 = vld [vmem:[#allocation7 + $0x3c] sm:$0xf]
    %v93 = vld [vmem:[%s3] sm:$0x1]
    %v95 = vperm.slane %v93, 0
    %v99 = vunpack.c.l.b16 %v75
    %v100 = vunpack.c.l.b16 %v76
    %v101 = vpack.c.b16 %v100, %v99
    %v119 = vunpack.c.l.b16 %v77
    %v120 = vunpack.c.l.b16 %v78
    %v121 = vunpack.c.l.b16 %v79
    %v122 = vunpack.c.l.b16 %v80
    %v123 = vunpack.c.l.b16 %v81
    %v124 = vunpack.c.l.b16 %v82
    %v125 = vunpack.c.l.b16 %v83
    %v126 = vunpack.c.l.b16 %v84
    %v127 = vunpack.c.l.b16 %v85
    %v128 = vunpack.c.l.b16 %v86
    %v129 = vunpack.c.l.b16 %v87
    %v130 = vunpack.c.l.b16 %v88
    %v131 = vunpack.c.l.b16 %v89
    %v132 = vunpack.c.l.b16 %v90
    %v133 = vunpack.c.l.b16 %v91
    %v134 = vunpack.c.l.b16 %v92
    %v135 = vpack.c.b16 %v120, %v119
    %v136 = vpack.c.b16 %v122, %v121
    %v137 = vpack.c.b16 %v124, %v123
    %v138 = vpack.c.b16 %v126, %v125
    %v139 = vpack.c.b16 %v128, %v127
    %v140 = vpack.c.b16 %v130, %v129
    %v141 = vpack.c.b16 %v132, %v131
    %v142 = vpack.c.b16 %v134, %v133
    %151 = vmatpush.bf16.msra.mxu0 %v142
    %152 = vmatpush.bf16.msra.mxu0 %v141
    %153 = vmatpush.bf16.msra.mxu0 %v140
    %154 = vmatpush.bf16.msra.mxu0 %v139
    %155 = vmatpush.bf16.msra.mxu0 %v138
    %156 = vmatpush.bf16.msra.mxu0 %v137
    %157 = vmatpush.bf16.msra.mxu0 %v136
    %158 = vmatpush.bf16.msra.mxu0 %v135
    %159 = vmatmul.bf16.gmra.mxu0 %v101
    %v160 = vpop.f32.mrf.mxu0
    %v161 = vadd.f32 %v95, %v160
    %v162 = vpop.f32.mrf.mxu0
    %v163 = vadd.f32 %v95, %v162
    %164 = vdwg.mxu0
    %v165 = vunpack.c.l.bf16 %v75
    %v166 = vunpack.c.l.bf16 %v76
    %v167 = vsub.f32 1.0, %v71
    %v168 = vsub.f32 1.0, %v72
    %v169 = vmul.f32 %v161, %v167
    %v170 = vmul.f32 %v163, %v168
    %v171 = vadd.f32 %v165, %v169
    %v172 = vadd.f32 %v166, %v170
    %v173 = vpack.c.bf16 %v171, %v171
    %v174 = vpack.c.bf16 %v172, %v172
    %175 = vst [vmem:[#allocation8] sm:$0xf] %v173
    %176 = vst [vmem:[#allocation8 + $0x4] sm:$0xf] %v174
    // Predicated region
    $region30: #{tpu_custom_call.1} parent=1 // pred_check
      _
    $region31: #{tpu_custom_call.1} parent=1 // pred_check_branch
      %178 = sbr.rel (0) target = $region33
    $region32: #{tpu_custom_call.1} parent=1 // pred_region
      %180 = vsyncadd [#allocation4], 0
      %s181 = sshll.u32 [#allocation8], 4
      %s182 = int_to_ptr.vmem [resolvable:$true] %s181
      %s183 = sshll.u32 %s4, 4
      %s184 = int_to_ptr.hbm [resolvable:$true] %s183
      %189 = dma.vmem_to_hbm [thread:$0]  %s182, 128, %s184, [#allocation4], 64, 64, 4
    $region33: #{tpu_custom_call.1} parent=1 // pred_fallthru
      _
    // Predicated region
    $region34: #{tpu_custom_call.1} parent=1 // pred_check
      _
    $region35: #{tpu_custom_call.1} parent=1 // pred_check_branch
      %191 = sbr.rel (0) target = $region37
    $region36: #{tpu_custom_call.1} parent=1 // pred_region
      %193 = dma.done [#allocation4], 128
    $region37: #{tpu_custom_call.1} parent=1 // pred_fallthru
      _
    %194 = vsyncpa [#allocation3], 1
    %195 = vsyncpa [#allocation6], 1
    %196 = vsyncpa [#allocation4], 1

</llo_original>
